<compile_context>
chip_gen: v6e
topology: v6e:2x2x1
jax: 0.10.0
libtpu: 0.0.40
codegen_flags: <defaults>
</compile_context>

<pallas_src>
import math
import jax
import jax.numpy as jnp
from jax.experimental import pallas as pl
from jax.experimental.pallas import tpu as pltpu


# --------------------------------------------------------------------------- #
# Kernel
# --------------------------------------------------------------------------- #
def merge_layer_kernel(x_ref, w1_ref, b1_ref, w2_ref, b2_ref, out_ref):
    # fc1: single K=(dim1+dim2) bf16 MXU matmul, f32 accumulation.
    h = jnp.dot(x_ref[...], w1_ref[...], preferred_element_type=jnp.float32)
    h = jnp.maximum(h + b1_ref[...], 0.0)            # bias + ReLU in f32 (VPU)
    # fc2: cast the activation back to the MXU dtype, accumulate in f32.
    y = jnp.dot(h.astype(w2_ref.dtype), w2_ref[...],
                preferred_element_type=jnp.float32)
    out_ref[...] = (y + b2_ref[...]).astype(out_ref.dtype)


# --------------------------------------------------------------------------- #
# Wrapper helpers
# --------------------------------------------------------------------------- #
def _vmem_budget_bytes():
    """Conservative per-kernel VMEM budget with headroom for double buffers.

    v7x has only 64 MiB physical VMEM per TensorCore, so never request all of
    it; v5e/v6e (128 MiB) get a larger budget.  Falls back to 40 MiB if the
    hardware query is unavailable.
    """
    try:
        cap = pltpu.get_tpu_info().vmem_capacity_bytes
        return int(min(cap * 5 // 8, 80 << 20))       # 40 MiB on v7x, 80 MiB on v5e/v6e
    except Exception:
        return 40 << 20


def _choose_tile_rows(batch, din, dout, in_itemsize, out_itemsize, budget, requested):
    """Pick the batch tile size: as large as requested/VMEM allows, sublane-aligned."""
    if requested >= batch:
        return batch                                   # one block == full dim (always legal)
    # Double-buffered input + output tiles must fit comfortably in the budget
    # (weights here are a few KB and resident, so they are ignored).
    row_bytes = 2 * (din * in_itemsize + dout * out_itemsize)
    cap = max(8, (budget // 2) // max(row_bytes, 1))
    tm = min(requested, cap)
    return max(8, (tm // 8) * 8)                       # multiple of 8 sublanes


def prepare_params(w1, b1, w2, b2, compute_dtype=jnp.bfloat16):
    """One-time weight preprocessing (hoisted out of the forward call).

    w1: (dim3, dim1+dim2), w2: (dim4, dim3) -- PyTorch Linear layout.
    Stores (in, out)-major bf16 weights for the MXU and f32 row-vector biases.
    """
    d3 = w1.shape[0]
    d4 = w2.shape[0]
    return dict(
        w1t=jnp.asarray(w1.T, compute_dtype),          # (dim1+dim2, dim3)
        b1=jnp.asarray(b1, jnp.float32).reshape(1, d3),
        w2t=jnp.asarray(w2.T, compute_dtype),          # (dim3, dim4)
        b2=jnp.asarray(b2, jnp.float32).reshape(1, d4),
    )


def merge_layer(x1, x2, params, *, tile_rows=512, out_dtype=None):
    """Fused MergeLayer forward.  x1: (B, dim1), x2: (B, dim2)."""
    B, d1 = x1.shape
    B2, d2 = x2.shape
    assert B == B2, (B, B2)
    w1t, b1, w2t, b2 = params["w1t"], params["b1"], params["w2t"], params["b2"]
    din, d3 = w1t.shape
    d3_, d4 = w2t.shape
    assert din == d1 + d2 and d3_ == d3

    cdtype = w1t.dtype
    out_dtype = out_dtype if out_dtype is not None else x1.dtype

    # concat + bf16 cast fuse into a single XLA copy -> one lane-dense activation
    # stream for the kernel and half the HBM read bytes vs f32.
    x = jnp.concatenate([x1, x2], axis=1).astype(cdtype)

    budget = _vmem_budget_bytes()
    tm = _choose_tile_rows(B, din, d4,
                           jnp.dtype(cdtype).itemsize, jnp.dtype(out_dtype).itemsize,
                           budget, tile_rows)
    grid = (pl.cdiv(B, tm),)

    return pl.pallas_call(
        merge_layer_kernel,
        out_shape=jax.ShapeDtypeStruct((B, d4), out_dtype),
        grid=grid,
        in_specs=[
            pl.BlockSpec((tm, din), lambda i: (i, 0)),   # batch-tiled activations
            pl.BlockSpec((din, d3), lambda i: (0, 0)),   # weights: VMEM-resident
            pl.BlockSpec((1, d3),   lambda i: (0, 0)),   # biases:  VMEM-resident
            pl.BlockSpec((d3, d4),  lambda i: (0, 0)),
            pl.BlockSpec((1, d4),   lambda i: (0, 0)),
        ],
        out_specs=pl.BlockSpec((tm, d4), lambda i: (i, 0)),
        compiler_params=pltpu.CompilerParams(
            dimension_semantics=("parallel",),           # megacore sharding on v7x
            vmem_limit_bytes=budget,
        ),
    )(x, w1t, b1, w2t, b2)


# --------------------------------------------------------------------------- #
# Parameter init + references
# --------------------------------------------------------------------------- #
def init_params(key, dim1, dim2, dim3, dim4, dtype=jnp.float32):
    """Synthetic init matching the PyTorch module: xavier-normal weights,
    default-Linear uniform biases."""
    k1, k2, k3, k4 = jax.random.split(key, 4)
    fan_in1 = dim1 + dim2
    std1 = math.sqrt(2.0 / (fan_in1 + dim3))
    std2 = math.sqrt(2.0 / (dim3 + dim4))
    w1 = std1 * jax.random.normal(k1, (dim3, fan_in1), dtype)
    w2 = std2 * jax.random.normal(k2, (dim4, dim3), dtype)
    bnd1 = 1.0 / math.sqrt(fan_in1)
    bnd2 = 1.0 / math.sqrt(dim3)
    b1 = jax.random.uniform(k3, (dim3,), dtype, -bnd1, bnd1)
    b2 = jax.random.uniform(k4, (dim4,), dtype, -bnd2, bnd2)
    return w1, b1, w2, b2


def merge_layer_ref(x1, x2, w1, b1, w2, b2):
    """Pure-JAX f32 reference mirroring the PyTorch forward exactly."""
    x = jnp.concatenate([x1, x2], axis=1)
    h = jnp.maximum(x @ w1.T + b1, 0.0)
    return h @ w2.T + b2


def merge_layer_ref_mixed(x1, x2, params):
    """Reference mirroring the kernel's bf16-operand / f32-accumulate math."""
    cdtype = params["w1t"].dtype
    x = jnp.concatenate([x1, x2], axis=1).astype(cdtype)
    h = jnp.dot(x, params["w1t"], preferred_element_type=jnp.float32) + params["b1"]
    h = jnp.maximum(h, 0.0)
    y = jnp.dot(h.astype(cdtype), params["w2t"],
                preferred_element_type=jnp.float32) + params["b2"]
    return y


# --------------------------------------------------------------------------- #
# Demo / correctness check
# --------------------------------------------------------------------------- #
if __name__ == "__main__":
    # Small shapes consistent with the module; B/tile_rows chosen so the grid
    # has several steps and exercises pipelining + weight residency.
    B, dim1, dim2, dim3, dim4 = 512, 32, 32, 64, 16

    key = jax.random.PRNGKey(0)
    kx1, kx2, kp = jax.random.split(key, 3)
    x1 = jax.random.normal(kx1, (B, dim1), jnp.float32)
    x2 = jax.random.normal(kx2, (B, dim2), jnp.float32)
    w1, b1, w2, b2 = init_params(kp, dim1, dim2, dim3, dim4)

    params = prepare_params(w1, b1, w2, b2, compute_dtype=jnp.bfloat16)

    out = merge_layer(x1, x2, params, tile_rows=128)   # grid=(4,)
    out = jax.block_until_ready(out)

    assert out.shape == (B, dim4), out.shape

    # Implementation fidelity: matches a bf16-operand / f32-accumulate reference.
    ref_mixed = merge_layer_ref_mixed(x1, x2, params)
    assert jnp.allclose(out.astype(jnp.float32), ref_mixed, atol=5e-3, rtol=5e-3), \
        "mismatch vs bf16/f32 reference"

    # Semantic fidelity: close to the full-f32 PyTorch forward (bf16 rounding slack).
    ref_f32 = merge_layer_ref(x1, x2, w1, b1, w2, b2)
    assert jnp.allclose(out.astype(jnp.float32), ref_f32, atol=1e-1, rtol=5e-2), \
        "mismatch vs f32 reference"

    print("KERNEL_OK")
</pallas_src>

<mosaic_0001>
module attributes {stable_mosaic.version = 11 : i64} {
  func.func @merge_layer_kernel(%arg0: i32, %arg1: memref<128x64xbf16, #tpu.memory_space<vmem>>, %arg2: memref<64x64xbf16, #tpu.memory_space<vmem>>, %arg3: memref<1x64xf32, #tpu.memory_space<vmem>>, %arg4: memref<64x16xbf16, #tpu.memory_space<vmem>>, %arg5: memref<1x16xf32, #tpu.memory_space<vmem>>, %arg6: memref<128x16xf32, #tpu.memory_space<vmem>>) attributes {dimension_semantics = [#tpu.dimension_semantics<parallel>], iteration_bounds = array<i64: 4>, scalar_prefetch = 0 : i64, scratch_operands = 0 : i64, tpu.core_type = #tpu.core_type<tc>, window_params = [{transform_indices = @transform_0, window_bounds = array<i64: 128, 64>}, {pipeline_mode = #tpu.pipeline_mode<synchronous>, transform_indices = @transform_1, window_bounds = array<i64: 64, 64>}, {pipeline_mode = #tpu.pipeline_mode<synchronous>, transform_indices = @transform_2, window_bounds = array<i64: 1, 64>}, {pipeline_mode = #tpu.pipeline_mode<synchronous>, transform_indices = @transform_3, window_bounds = array<i64: 64, 16>}, {pipeline_mode = #tpu.pipeline_mode<synchronous>, transform_indices = @transform_4, window_bounds = array<i64: 1, 16>}, {transform_indices = @transform_5, window_bounds = array<i64: 128, 16>}]} {
    %c0 = arith.constant 0 : index
    %c0_0 = arith.constant 0 : index
    %0 = vector.load %arg1[%c0, %c0_0] : memref<128x64xbf16, #tpu.memory_space<vmem>>, vector<128x64xbf16>
    %c0_1 = arith.constant 0 : index
    %c0_2 = arith.constant 0 : index
    %1 = vector.load %arg2[%c0_1, %c0_2] : memref<64x64xbf16, #tpu.memory_space<vmem>>, vector<64x64xbf16>
    %cst = arith.constant dense<0.000000e+00> : vector<128x64xf32>
    %2 = tpu.matmul %0, %1, %cst {dimension_numbers = #tpu.dot_dimension_numbers<[1], [0], [0], [1], [0, 0, 1, 1], [], []>} : vector<128x64xbf16>, vector<64x64xbf16>, vector<128x64xf32> -> vector<128x64xf32>
    %c0_3 = arith.constant 0 : index
    %c0_4 = arith.constant 0 : index
    %3 = vector.load %arg3[%c0_3, %c0_4] : memref<1x64xf32, #tpu.memory_space<vmem>>, vector<1x64xf32>
    %4 = vector.broadcast %3 : vector<1x64xf32> to vector<128x64xf32>
    %5 = arith.addf %2, %4 : vector<128x64xf32>
    %cst_5 = arith.constant 0.000000e+00 : f32
    %6 = vector.broadcast %cst_5 : f32 to vector<128x64xf32>
    %7 = arith.maximumf %5, %6 : vector<128x64xf32>
    %8 = arith.truncf %7 : vector<128x64xf32> to vector<128x64xbf16>
    %c0_6 = arith.constant 0 : index
    %c0_7 = arith.constant 0 : index
    %9 = vector.load %arg4[%c0_6, %c0_7] : memref<64x16xbf16, #tpu.memory_space<vmem>>, vector<64x16xbf16>
    %cst_8 = arith.constant dense<0.000000e+00> : vector<128x16xf32>
    %10 = tpu.matmul %8, %9, %cst_8 {dimension_numbers = #tpu.dot_dimension_numbers<[1], [0], [0], [1], [0, 0, 1, 1], [], []>} : vector<128x64xbf16>, vector<64x16xbf16>, vector<128x16xf32> -> vector<128x16xf32>
    %c0_9 = arith.constant 0 : index
    %c0_10 = arith.constant 0 : index
    %11 = vector.load %arg5[%c0_9, %c0_10] : memref<1x16xf32, #tpu.memory_space<vmem>>, vector<1x16xf32>
    %12 = vector.broadcast %11 : vector<1x16xf32> to vector<128x16xf32>
    %13 = arith.addf %10, %12 : vector<128x16xf32>
    %c0_11 = arith.constant 0 : index
    %c0_12 = arith.constant 0 : index
    %14 = vector.load %arg6[%c0_11, %c0_12] : memref<128x16xf32, #tpu.memory_space<vmem>>, vector<128x16xf32>
    tpu.vector_store %arg6[%c0_11, %c0_12], %13 {strides = array<i32>} : memref<128x16xf32, #tpu.memory_space<vmem>>, vector<128x16xf32>,
    return
  }
  func.func @transform_0(%arg0: i32) -> (i32, i32) {
    %c0_i32 = arith.constant 0 : i32
    %c0_i32_0 = arith.constant 0 : i32
    return %arg0, %c0_i32 : i32, i32
  }
  func.func @transform_1(%arg0: i32) -> (i32, i32) {
    %c0_i32 = arith.constant 0 : i32
    %c0_i32_0 = arith.constant 0 : i32
    %c0_i32_1 = arith.constant 0 : i32
    return %c0_i32, %c0_i32_0 : i32, i32
  }
  func.func @transform_2(%arg0: i32) -> (i32, i32) {
    %c0_i32 = arith.constant 0 : i32
    %c0_i32_0 = arith.constant 0 : i32
    %c0_i32_1 = arith.constant 0 : i32
    return %c0_i32, %c0_i32_0 : i32, i32
  }
  func.func @transform_3(%arg0: i32) -> (i32, i32) {
    %c0_i32 = arith.constant 0 : i32
    %c0_i32_0 = arith.constant 0 : i32
    %c0_i32_1 = arith.constant 0 : i32
    return %c0_i32, %c0_i32_0 : i32, i32
  }
  func.func @transform_4(%arg0: i32) -> (i32, i32) {
    %c0_i32 = arith.constant 0 : i32
    %c0_i32_0 = arith.constant 0 : i32
    %c0_i32_1 = arith.constant 0 : i32
    return %c0_i32, %c0_i32_0 : i32, i32
  }
  func.func @transform_5(%arg0: i32) -> (i32, i32) {
    %c0_i32 = arith.constant 0 : i32
    %c0_i32_0 = arith.constant 0 : i32
    return %arg0, %c0_i32 : i32, i32
  }
}

</mosaic_0001>

<llo_original>
// kernel: tpu_custom_call.1
$region0: #{tpu_custom_call.1}
  #allocation0 [shape = 'u32[]', space=smem, size = 0x4, offset = 0x4, fixed_abs, tag = 'smem constant byte address 0x4 - core index']
  #allocation1 [shape = 'u32[144,128]{1,0:T(1,128)}', space=vmem, size = 0x12000, scoped, tag = 'internal scratch']
  %s0 = inlined_call_operand.vmem [shape: bf16[512,64], index: 0, kind: input, shape index: {}]
  %s1 = inlined_call_operand.vmem [shape: bf16[64,64], index: 1, kind: input, shape index: {}]
  %s2 = inlined_call_operand.vmem [shape: f32[1,64], index: 2, kind: input, shape index: {}]
  %s3 = inlined_call_operand.vmem [shape: bf16[64,16], index: 3, kind: input, shape index: {}]
  %s4 = inlined_call_operand.vmem [shape: f32[1,16], index: 4, kind: input, shape index: {}]
  %s5 = inlined_call_operand.vmem [shape: f32[512,16], index: 5, kind: output, shape index: {}]
  %s6 = sld [smem:[#allocation0]]
  $region53: #{tpu_custom_call.1} parent=0
    _
  %s8 = ssub.s32 1, %s6
  %s9 = scalar_select 0, %s8, %s6
  loop: start=0, step=1, limit=6
  $region2: #{tpu_custom_call.1} parent=0 // loop_pre_header
    _
  $region3: #{tpu_custom_call.1} parent=0 // loop_header
    %s11 = sphi 0, %s15
    %p12 = scmp.ge.s32.totalorder %s11, 6
    %s21 = sphi 0, %s23
    %s24 = sphi 0, %s21
    %s25 = sphi 0, %s24
    %s41 = sphi 0, %s25
    %s45 = sphi 0, %s45
    %s47 = sphi 0, %s45
    %s48 = sphi 0, %s47
    %s62 = sphi 0, %s48
    %s66 = sphi 0, %s66
    %s68 = sphi 0, %s66
    %s69 = sphi 0, %s68
    %s83 = sphi 0, %s69
    %s87 = sphi 0, %s87
    %s89 = sphi 0, %s87
    %s90 = sphi 0, %s89
    %s104 = sphi 0, %s90
    %s108 = sphi 0, %s108
    %s110 = sphi 0, %s108
    %s111 = sphi 0, %s110
    %s125 = sphi 0, %s111
    %s131 = sphi 0, %s133
    %s134 = sphi 0, %s131
    %s135 = sphi 0, %s134
    %s151 = sphi 0, %s135
  $region4: #{tpu_custom_call.1} parent=0 // loop_header_branch
    %14 = sbr.rel (%p12) target = $region8
  $region5: #{tpu_custom_call.1} parent=0 // loop_body
    %s16 = ssub.s32 %s11, 1
    %s17 = ssub.s32 %s11, 2
    %s18 = sadd.s32 %s11, 1
    %s19 = ssub.s32 %s11, %s18
    %p20 = scmp.eq.s32.totalorder %s19, 0
    %s22 = sadd.s32 %s21, 1
    %s23 = scalar_select %p20, %s21, %s22
    %p26 = pneg %p20
    %p27 = scmp.eq.s32.totalorder %s11, 3
    %p28 = por %p26, %p27
    %p29 = scmp.ne.s32.totalorder %s21, %s24
    %p30 = scmp.eq.s32.totalorder %s11, 0
    %p31 = por %p29, %p30
    %p32 = scmp.ne.s32.totalorder %s21, %s24
    %p33 = scmp.eq.s32.totalorder %s16, 3
    %p34 = por %p32, %p33
    %p35 = scmp.ne.s32.totalorder %s24, %s25
    %p36 = scmp.eq.s32.totalorder %s16, 0
    %p37 = por %p35, %p36
    %p38 = scmp.ne.s32.totalorder %s24, %s25
    %p39 = scmp.eq.s32.totalorder %s17, 3
    %p40 = por %p38, %p39
    %p42 = scmp.ne.s32.totalorder %s25, %s41
    %p43 = scmp.eq.s32.totalorder %s17, 0
    %p44 = por %p42, %p43
    %s46 = sadd.s32 %s45, 1
    %p49 = scmp.eq.s32.totalorder %s11, 3
    %p50 = scmp.ne.s32.totalorder %s45, %s47
    %p51 = scmp.eq.s32.totalorder %s11, 0
    %p52 = por %p50, %p51
    %p53 = scmp.ne.s32.totalorder %s45, %s47
    %p54 = scmp.eq.s32.totalorder %s16, 3
    %p55 = por %p53, %p54
    %p56 = scmp.ne.s32.totalorder %s47, %s48
    %p57 = scmp.eq.s32.totalorder %s16, 0
    %p58 = por %p56, %p57
    %p59 = scmp.ne.s32.totalorder %s47, %s48
    %p60 = scmp.eq.s32.totalorder %s17, 3
    %p61 = por %p59, %p60
    %p63 = scmp.ne.s32.totalorder %s48, %s62
    %p64 = scmp.eq.s32.totalorder %s17, 0
    %p65 = por %p63, %p64
    %s67 = sadd.s32 %s66, 1
    %p70 = scmp.eq.s32.totalorder %s11, 3
    %p71 = scmp.ne.s32.totalorder %s66, %s68
    %p72 = scmp.eq.s32.totalorder %s11, 0
    %p73 = por %p71, %p72
    %p74 = scmp.ne.s32.totalorder %s66, %s68
    %p75 = scmp.eq.s32.totalorder %s16, 3
    %p76 = por %p74, %p75
    %p77 = scmp.ne.s32.totalorder %s68, %s69
    %p78 = scmp.eq.s32.totalorder %s16, 0
    %p79 = por %p77, %p78
    %p80 = scmp.ne.s32.totalorder %s68, %s69
    %p81 = scmp.eq.s32.totalorder %s17, 3
    %p82 = por %p80, %p81
    %p84 = scmp.ne.s32.totalorder %s69, %s83
    %p85 = scmp.eq.s32.totalorder %s17, 0
    %p86 = por %p84, %p85
    %s88 = sadd.s32 %s87, 1
    %p91 = scmp.eq.s32.totalorder %s11, 3
    %p92 = scmp.ne.s32.totalorder %s87, %s89
    %p93 = scmp.eq.s32.totalorder %s11, 0
    %p94 = por %p92, %p93
    %p95 = scmp.ne.s32.totalorder %s87, %s89
    %p96 = scmp.eq.s32.totalorder %s16, 3
    %p97 = por %p95, %p96
    %p98 = scmp.ne.s32.totalorder %s89, %s90
    %p99 = scmp.eq.s32.totalorder %s16, 0
    %p100 = por %p98, %p99
    %p101 = scmp.ne.s32.totalorder %s89, %s90
    %p102 = scmp.eq.s32.totalorder %s17, 3
    %p103 = por %p101, %p102
    %p105 = scmp.ne.s32.totalorder %s90, %s104
    %p106 = scmp.eq.s32.totalorder %s17, 0
    %p107 = por %p105, %p106
    %s109 = sadd.s32 %s108, 1
    %p112 = scmp.eq.s32.totalorder %s11, 3
    %p113 = scmp.ne.s32.totalorder %s108, %s110
    %p114 = scmp.eq.s32.totalorder %s11, 0
    %p115 = por %p113, %p114
    %p116 = scmp.ne.s32.totalorder %s108, %s110
    %p117 = scmp.eq.s32.totalorder %s16, 3
    %p118 = por %p116, %p117
    %p119 = scmp.ne.s32.totalorder %s110, %s111
    %p120 = scmp.eq.s32.totalorder %s16, 0
    %p121 = por %p119, %p120
    %p122 = scmp.ne.s32.totalorder %s110, %s111
    %p123 = scmp.eq.s32.totalorder %s17, 3
    %p124 = por %p122, %p123
    %p126 = scmp.ne.s32.totalorder %s111, %s125
    %p127 = scmp.eq.s32.totalorder %s17, 0
    %p128 = por %p126, %p127
    %s129 = ssub.s32 %s11, %s18
    %p130 = scmp.eq.s32.totalorder %s129, 0
    %s132 = sadd.s32 %s131, 1
    %s133 = scalar_select %p130, %s131, %s132
    %p136 = pneg %p130
    %p137 = scmp.eq.s32.totalorder %s11, 3
    %p138 = por %p136, %p137
    %p139 = scmp.ne.s32.totalorder %s131, %s134
    %p140 = scmp.eq.s32.totalorder %s11, 0
    %p141 = por %p139, %p140
    %p142 = scmp.ne.s32.totalorder %s131, %s134
    %p143 = scmp.eq.s32.totalorder %s16, 3
    %p144 = por %p142, %p143
    %p145 = scmp.ne.s32.totalorder %s134, %s135
    %p146 = scmp.eq.s32.totalorder %s16, 0
    %p147 = por %p145, %p146
    %p148 = scmp.ne.s32.totalorder %s134, %s135
    %p149 = scmp.eq.s32.totalorder %s17, 3
    %p150 = por %p148, %p149
    %p152 = scmp.ne.s32.totalorder %s135, %s151
    %p153 = scmp.eq.s32.totalorder %s17, 0
    %p154 = por %p152, %p153
    %p155 = scmp.le.s32.totalorder 1, %s11
    %p156 = scmp.lt.s32.totalorder %s11, 5
    %p157 = pnand %p155, %p156
    %p158 = pneg %p157
    // Predicated region
    $region9: #{tpu_custom_call.1} parent=5 // pred_check
      _
    $region10: #{tpu_custom_call.1} parent=5 // pred_check_branch
      %160 = sbr.rel (%p157) target = $region12
    $region11: #{tpu_custom_call.1} parent=5 // pred_region
      %s161 = ssub.s32 %s11, 1
      // Predicated region
      $region13: #{tpu_custom_call.1} parent=11 // pred_check
        %p162 = pneg %p58
      $region14: #{tpu_custom_call.1} parent=11 // pred_check_branch
        %164 = sbr.rel (%p162) target = $region16
      $region15: #{tpu_custom_call.1} parent=11 // pred_region
        _
      $region16: #{tpu_custom_call.1} parent=11 // pred_fallthru
        _
      // Predicated region
      $region17: #{tpu_custom_call.1} parent=11 // pred_check
        %p165 = pneg %p79
      $region18: #{tpu_custom_call.1} parent=11 // pred_check_branch
        %167 = sbr.rel (%p165) target = $region20
      $region19: #{tpu_custom_call.1} parent=11 // pred_region
        _
      $region20: #{tpu_custom_call.1} parent=11 // pred_fallthru
        _
      // Predicated region
      $region21: #{tpu_custom_call.1} parent=11 // pred_check
        %p168 = pneg %p100
      $region22: #{tpu_custom_call.1} parent=11 // pred_check_branch
        %170 = sbr.rel (%p168) target = $region24
      $region23: #{tpu_custom_call.1} parent=11 // pred_region
        _
      $region24: #{tpu_custom_call.1} parent=11 // pred_fallthru
        _
      // Predicated region
      $region25: #{tpu_custom_call.1} parent=11 // pred_check
        %p171 = pneg %p121
      $region26: #{tpu_custom_call.1} parent=11 // pred_check_branch
        %173 = sbr.rel (%p171) target = $region28
      $region27: #{tpu_custom_call.1} parent=11 // pred_region
        _
      $region28: #{tpu_custom_call.1} parent=11 // pred_fallthru
        _
    $region12: #{tpu_custom_call.1} parent=5 // pred_fallthru
      _
    %p174 = scmp.lt.s32.totalorder %s11, 4
    // Predicated region
    $region29: #{tpu_custom_call.1} parent=5 // pred_check
      %p175 = pneg %p174
    $region30: #{tpu_custom_call.1} parent=5 // pred_check_branch
      %177 = sbr.rel (%p175) target = $region32
    $region31: #{tpu_custom_call.1} parent=5 // pred_region
      // Predicated region
      $region33: #{tpu_custom_call.1} parent=31 // pred_check
        %p178 = pneg %p31
      $region34: #{tpu_custom_call.1} parent=31 // pred_check_branch
        %180 = sbr.rel (%p178) target = $region36
      $region35: #{tpu_custom_call.1} parent=31 // pred_region
        %s181 = smul.u32 16, %s11
        %p182 = scmp.lt.s32.totalorder %s181, 63
        %s183 = scalar_select %p182, %s181, 63
        %s184 = smul.addr %s183, 4
        %s185 = scalar_lea.vmem %s0, %s184
        %s186 = smul.u32 16, %s11
      $region36: #{tpu_custom_call.1} parent=31 // pred_fallthru
        _
    $region32: #{tpu_custom_call.1} parent=5 // pred_fallthru
      _
    %p187 = scmp.le.s32.totalorder 1, %s11
    %p188 = scmp.lt.s32.totalorder %s11, 5
    %p189 = pnand %p187, %p188
    %p190 = pneg %p189
    // Predicated region
    $region37: #{tpu_custom_call.1} parent=5 // pred_check
      _
    $region38: #{tpu_custom_call.1} parent=5 // pred_check_branch
      %192 = sbr.rel (%p189) target = $region40
    $region39: #{tpu_custom_call.1} parent=5 // pred_region
      %s193 = ssub.s32 %s11, 1
      %s194 = smul.u32 16, %s16
      %p195 = scmp.lt.s32.totalorder %s194, 63
      %s196 = scalar_select %p195, %s194, 63
      %s197 = smul.addr %s196, 4
      %s198 = scalar_lea.vmem %s0, %s197
      %p199 = pneg %p37
      %p200 = pneg %p34
      %p201 = pneg %p58
      %p202 = pneg %p55
      %p203 = pneg %p79
      %p204 = pneg %p76
      %p205 = pneg %p100
      %p206 = pneg %p97
      %p207 = pneg %p121
      %p208 = pneg %p118
      %p209 = pneg %p147
      %p210 = pneg %p144
      %s211 = smul.u32 16, %s16
      %p212 = scmp.lt.s32.totalorder %s211, 63
      %s213 = scalar_select %p212, %s211, 63
      %s214 = smul.addr %s213, 8
      %s215 = scalar_lea.vmem %s5, %s214
      %s216 = smul.u32 16, %s16
      %p217 = scmp.lt.s32.totalorder %s216, 63
      %s218 = scalar_select %p217, %s216, 63
      %s219 = smul.addr %s218, 4
      %s220 = scalar_lea.vmem %s0, %s219
      %s221 = smul.u32 16, %s16
      %s222 = smul.u32 16, %s16
      %p223 = scmp.lt.s32.totalorder %s222, 63
      %s224 = scalar_select %p223, %s222, 63
      %s225 = smul.addr %s224, 8
      %s226 = scalar_lea.vmem %s5, %s225
      %s227 = smul.u32 16, %s16
      %v229 = vld [vmem:[%s220] sm:$0xf]
      %v230 = vld [vmem:[%s220 + $0x4] sm:$0xf]
      %v231 = vld [vmem:[%s220 + $0x8] sm:$0xf]
      %v232 = vld [vmem:[%s220 + $0xc] sm:$0xf]
      %v233 = vld [vmem:[%s220 + $0x10] sm:$0xf]
      %v234 = vld [vmem:[%s220 + $0x14] sm:$0xf]
      %v235 = vld [vmem:[%s220 + $0x18] sm:$0xf]
      %v236 = vld [vmem:[%s220 + $0x1c] sm:$0xf]
      %v237 = vld [vmem:[%s220 + $0x20] sm:$0xf]
      %v238 = vld [vmem:[%s220 + $0x24] sm:$0xf]
      %v239 = vld [vmem:[%s220 + $0x28] sm:$0xf]
      %v240 = vld [vmem:[%s220 + $0x2c] sm:$0xf]
      %v241 = vld [vmem:[%s220 + $0x30] sm:$0xf]
      %v242 = vld [vmem:[%s220 + $0x34] sm:$0xf]
      %v243 = vld [vmem:[%s220 + $0x38] sm:$0xf]
      %v244 = vld [vmem:[%s220 + $0x3c] sm:$0xf]
      %v245 = vld [vmem:[%s1] sm:$0xf]
      %v246 = vld [vmem:[%s1 + $0x4] sm:$0xf]
      %v247 = vld [vmem:[%s1 + $0x8] sm:$0xf]
      %v248 = vld [vmem:[%s1 + $0xc] sm:$0xf]
      %v249 = vld [vmem:[%s1 + $0x10] sm:$0xf]
      %v250 = vld [vmem:[%s1 + $0x14] sm:$0xf]
      %v251 = vld [vmem:[%s1 + $0x18] sm:$0xf]
      %v252 = vld [vmem:[%s1 + $0x1c] sm:$0xf]
      %v253 = vld [vmem:[%s2] sm:$0x1]
      %v255 = vlaneseq
      %v256 = vshrl.u32 %v255, 7
      %v257 = vsub.s32 0, %v256
      %v258 = vrot.slane %v253, %v257
      %v276 = vunpack.c.l.b16 %v229
      %v277 = vunpack.c.l.b16 %v230
      %v278 = vunpack.c.l.b16 %v231
      %v279 = vunpack.c.l.b16 %v232
      %v280 = vunpack.c.l.b16 %v233
      %v281 = vunpack.c.l.b16 %v234
      %v282 = vunpack.c.l.b16 %v235
      %v283 = vunpack.c.l.b16 %v236
      %v284 = vunpack.c.l.b16 %v237
      %v285 = vunpack.c.l.b16 %v238
      %v286 = vunpack.c.l.b16 %v239
      %v287 = vunpack.c.l.b16 %v240
      %v288 = vunpack.c.l.b16 %v241
      %v289 = vunpack.c.l.b16 %v242
      %v290 = vunpack.c.l.b16 %v243
      %v291 = vunpack.c.l.b16 %v244
      %v292 = vpack.c.b16 %v277, %v276
      %v293 = vpack.c.b16 %v279, %v278
      %v294 = vpack.c.b16 %v281, %v280
      %v295 = vpack.c.b16 %v283, %v282
      %v296 = vpack.c.b16 %v285, %v284
      %v297 = vpack.c.b16 %v287, %v286
      %v298 = vpack.c.b16 %v289, %v288
      %v299 = vpack.c.b16 %v291, %v290
      %v308 = vunpack.c.l.b16 %v245
      %v309 = vunpack.c.l.b16 %v246
      %v310 = vunpack.c.l.b16 %v247
      %v311 = vunpack.c.l.b16 %v248
      %v312 = vunpack.c.l.b16 %v249
      %v313 = vunpack.c.l.b16 %v250
      %v314 = vunpack.c.l.b16 %v251
      %v315 = vunpack.c.l.b16 %v252
      %v316 = vpack.c.b16 %v309, %v308
      %v317 = vpack.c.b16 %v311, %v310
      %v318 = vpack.c.b16 %v313, %v312
      %v319 = vpack.c.b16 %v315, %v314
      %vm324 = vcmask 523264
      %v326 = vsel %vm324, %v292, 0
      %v329 = vsel %vm324, %v293, 0
      %v332 = vsel %vm324, %v294, 0
      %v335 = vsel %vm324, %v295, 0
      %v338 = vsel %vm324, %v296, 0
      %v341 = vsel %vm324, %v297, 0
      %v344 = vsel %vm324, %v298, 0
      %v347 = vsel %vm324, %v299, 0
      %349 = vmatprep.subr.bf16.mxu0 0
      %350 = vmatpush1.bf16.msra.mxu0 0
      %351 = vmatprep.subr.bf16.mxu0 0
      %352 = vmatpush1.bf16.msra.mxu0 0
      %353 = vmatprep.subr.bf16.mxu0 0
      %354 = vmatpush1.bf16.msra.mxu0 0
      %355 = vmatprep.subr.bf16.mxu0 0
      %356 = vmatpush1.bf16.msra.mxu0 0
      %357 = vmatprep.subr.bf16.mxu0 0
      %358 = vmatpush1.bf16.msra.mxu0 %v319
      %359 = vmatprep.subr.bf16.mxu0 0
      %360 = vmatpush1.bf16.msra.mxu0 %v318
      %361 = vmatprep.subr.bf16.mxu0 0
      %362 = vmatpush1.bf16.msra.mxu0 %v317
      %363 = vmatprep.subr.bf16.mxu0 0
      %364 = vmatpush1.bf16.msra.mxu0 %v316
      %365 = vmatprep.subr.bf16.mxu0 0
      %366 = vmatpush2.bf16.msra.mxu0 0
      %367 = vmatprep.subr.bf16.mxu0 0
      %368 = vmatpush2.bf16.msra.mxu0 0
      %369 = vmatprep.subr.bf16.mxu0 0
      %370 = vmatpush2.bf16.msra.mxu0 0
      %371 = vmatprep.subr.bf16.mxu0 0
      %372 = vmatpush2.bf16.msra.mxu0 0
      %373 = vmatprep.subr.bf16.mxu0 0
      %374 = vmatpush2.bf16.msra.mxu0 0
      %375 = vmatprep.subr.bf16.mxu0 0
      %376 = vmatpush2.bf16.msra.mxu0 0
      %377 = vmatprep.subr.bf16.mxu0 0
      %378 = vmatpush2.bf16.msra.mxu0 0
      %379 = vmatprep.subr.bf16.mxu0 0
      %380 = vmatpush2.bf16.msra.mxu0 0
      %381 = vmatprep.mubr.bf16.mxu0 0
      %382 = vmatmul.mubr.bf16.gmra.mxu0 %v326
      %v383 = vpop.f32.mrf.mxu0
      %v384 = vadd.f32 %v258, %v383
      %v385 = vpop.f32.mrf.mxu0
      %v386 = vpop.f32.mrf.mxu0
      %v387 = vadd.f32 %v258, %v386
      %v388 = vpop.f32.mrf.mxu0
      %389 = vmatprep.mubr.bf16.mxu0 0
      %390 = vmatmul.mubr.bf16.gmra.mxu0 %v329
      %v391 = vpop.f32.mrf.mxu0
      %v392 = vadd.f32 %v258, %v391
      %v393 = vpop.f32.mrf.mxu0
      %v394 = vpop.f32.mrf.mxu0
      %v395 = vadd.f32 %v258, %v394
      %v396 = vpop.f32.mrf.mxu0
      %397 = vmatprep.mubr.bf16.mxu0 0
      %398 = vmatmul.mubr.bf16.gmra.mxu0 %v332
      %v399 = vpop.f32.mrf.mxu0
      %v400 = vadd.f32 %v258, %v399
      %v401 = vpop.f32.mrf.mxu0
      %v402 = vpop.f32.mrf.mxu0
      %v403 = vadd.f32 %v258, %v402
      %v404 = vpop.f32.mrf.mxu0
      %405 = vmatprep.mubr.bf16.mxu0 0
      %406 = vmatmul.mubr.bf16.gmra.mxu0 %v335
      %v407 = vpop.f32.mrf.mxu0
      %v408 = vadd.f32 %v258, %v407
      %v409 = vpop.f32.mrf.mxu0
      %v410 = vpop.f32.mrf.mxu0
      %v411 = vadd.f32 %v258, %v410
      %v412 = vpop.f32.mrf.mxu0
      %413 = vmatprep.mubr.bf16.mxu0 0
      %414 = vmatmul.mubr.bf16.gmra.mxu0 %v338
      %v415 = vpop.f32.mrf.mxu0
      %v416 = vadd.f32 %v258, %v415
      %v417 = vpop.f32.mrf.mxu0
      %v418 = vpop.f32.mrf.mxu0
      %v419 = vadd.f32 %v258, %v418
      %v420 = vpop.f32.mrf.mxu0
      %421 = vmatprep.mubr.bf16.mxu0 0
      %422 = vmatmul.mubr.bf16.gmra.mxu0 %v341
      %v423 = vpop.f32.mrf.mxu0
      %v424 = vadd.f32 %v258, %v423
      %v425 = vpop.f32.mrf.mxu0
      %v426 = vpop.f32.mrf.mxu0
      %v427 = vadd.f32 %v258, %v426
      %v428 = vpop.f32.mrf.mxu0
      %429 = vmatprep.mubr.bf16.mxu0 0
      %430 = vmatmul.mubr.bf16.gmra.mxu0 %v344
      %v431 = vpop.f32.mrf.mxu0
      %v432 = vadd.f32 %v258, %v431
      %v433 = vpop.f32.mrf.mxu0
      %v434 = vpop.f32.mrf.mxu0
      %v435 = vadd.f32 %v258, %v434
      %v436 = vpop.f32.mrf.mxu0
      %437 = vmatprep.mubr.bf16.mxu0 0
      %438 = vmatmul.mubr.bf16.gmra.mxu0 %v347
      %v439 = vpop.f32.mrf.mxu0
      %v440 = vadd.f32 %v258, %v439
      %v441 = vpop.f32.mrf.mxu0
      %v442 = vpop.f32.mrf.mxu0
      %v443 = vadd.f32 %v258, %v442
      %v444 = vpop.f32.mrf.mxu0
      %445 = vdwg.mxu0
      %v446 = vmax.f32 %v384, 0.0
      %v447 = vmax.f32 %v387, 0.0
      %v448 = vmax.f32 %v392, 0.0
      %v449 = vmax.f32 %v395, 0.0
      %v450 = vmax.f32 %v400, 0.0
      %v451 = vmax.f32 %v403, 0.0
      %v452 = vmax.f32 %v408, 0.0
      %v453 = vmax.f32 %v411, 0.0
      %v454 = vmax.f32 %v416, 0.0
      %v455 = vmax.f32 %v419, 0.0
      %v456 = vmax.f32 %v424, 0.0
      %v457 = vmax.f32 %v427, 0.0
      %v458 = vmax.f32 %v432, 0.0
      %v459 = vmax.f32 %v435, 0.0
      %v460 = vmax.f32 %v440, 0.0
      %v461 = vmax.f32 %v443, 0.0
      %v462 = vpack.c.bf16 %v447, %v446
      %v463 = vpack.c.bf16 %v449, %v448
      %v464 = vpack.c.bf16 %v451, %v450
      %v465 = vpack.c.bf16 %v453, %v452
      %v466 = vpack.c.bf16 %v455, %v454
      %v467 = vpack.c.bf16 %v457, %v456
      %v468 = vpack.c.bf16 %v459, %v458
      %v469 = vpack.c.bf16 %v461, %v460
      %v470 = vld [vmem:[%s3] sm:$0xf]
      %v471 = vld [vmem:[%s3 + $0x4] sm:$0xf]
      %v472 = vld [vmem:[%s3 + $0x8] sm:$0xf]
      %v473 = vld [vmem:[%s3 + $0xc] sm:$0xf]
      %v474 = vld [vmem:[%s3 + $0x10] sm:$0xf]
      %v475 = vld [vmem:[%s3 + $0x14] sm:$0xf]
      %v476 = vld [vmem:[%s3 + $0x18] sm:$0xf]
      %v477 = vld [vmem:[%s3 + $0x1c] sm:$0xf]
      %v478 = vld [vmem:[%s4] sm:$0x1]
      %v480 = vlaneseq
      %v481 = vshrl.u32 %v480, 7
      %v482 = vsub.s32 0, %v481
      %v483 = vrot.slane %v478, %v482
      %v493 = vunpack.c.l.b16 %v470
      %v494 = vunpack.c.l.b16 %v471
      %v495 = vunpack.c.l.b16 %v472
      %v496 = vunpack.c.l.b16 %v473
      %v497 = vunpack.c.l.b16 %v474
      %v498 = vunpack.c.l.b16 %v475
      %v499 = vunpack.c.l.b16 %v476
      %v500 = vunpack.c.l.b16 %v477
      %v501 = vpack.c.b16 %v494, %v493
      %v502 = vpack.c.b16 %v496, %v495
      %v503 = vpack.c.b16 %v498, %v497
      %v504 = vpack.c.b16 %v500, %v499
      %v510 = vsel %vm324, %v462, 0
      %v513 = vsel %vm324, %v463, 0
      %v516 = vsel %vm324, %v464, 0
      %v519 = vsel %vm324, %v465, 0
      %v522 = vsel %vm324, %v466, 0
      %v525 = vsel %vm324, %v467, 0
      %v528 = vsel %vm324, %v468, 0
      %v531 = vsel %vm324, %v469, 0
      %533 = vmatprep.subr.bf16.mxu0 0
      %534 = vmatpush1.bf16.msra.mxu0 0
      %535 = vmatprep.subr.bf16.mxu0 0
      %536 = vmatpush1.bf16.msra.mxu0 0
      %537 = vmatprep.subr.bf16.mxu0 0
      %538 = vmatpush1.bf16.msra.mxu0 0
      %539 = vmatprep.subr.bf16.mxu0 0
      %540 = vmatpush1.bf16.msra.mxu0 0
      %541 = vmatprep.subr.bf16.mxu0 0
      %542 = vmatpush1.bf16.msra.mxu0 %v504
      %543 = vmatprep.subr.bf16.mxu0 0
      %544 = vmatpush1.bf16.msra.mxu0 %v503
      %545 = vmatprep.subr.bf16.mxu0 0
      %546 = vmatpush1.bf16.msra.mxu0 %v502
      %547 = vmatprep.subr.bf16.mxu0 0
      %548 = vmatpush1.bf16.msra.mxu0 %v501
      %549 = vmatprep.subr.bf16.mxu0 0
      %550 = vmatpush2.bf16.msra.mxu0 0
      %551 = vmatprep.subr.bf16.mxu0 0
      %552 = vmatpush2.bf16.msra.mxu0 0
      %553 = vmatprep.subr.bf16.mxu0 0
      %554 = vmatpush2.bf16.msra.mxu0 0
      %555 = vmatprep.subr.bf16.mxu0 0
      %556 = vmatpush2.bf16.msra.mxu0 0
      %557 = vmatprep.subr.bf16.mxu0 0
      %558 = vmatpush2.bf16.msra.mxu0 0
      %559 = vmatprep.subr.bf16.mxu0 0
      %560 = vmatpush2.bf16.msra.mxu0 0
      %561 = vmatprep.subr.bf16.mxu0 0
      %562 = vmatpush2.bf16.msra.mxu0 0
      %563 = vmatprep.subr.bf16.mxu0 0
      %564 = vmatpush2.bf16.msra.mxu0 0
      %565 = vmatprep.mubr.bf16.mxu0 0
      %566 = vmatmul.mubr.bf16.gmra.mxu0 %v510
      %v567 = vpop.f32.mrf.mxu0
      %v568 = vadd.f32 %v483, %v567
      %v569 = vpop.f32.mrf.mxu0
      %v570 = vpop.f32.mrf.mxu0
      %v571 = vadd.f32 %v483, %v570
      %v572 = vpop.f32.mrf.mxu0
      %573 = vmatprep.mubr.bf16.mxu0 0
      %574 = vmatmul.mubr.bf16.gmra.mxu0 %v513
      %v575 = vpop.f32.mrf.mxu0
      %v576 = vadd.f32 %v483, %v575
      %v577 = vpop.f32.mrf.mxu0
      %v578 = vpop.f32.mrf.mxu0
      %v579 = vadd.f32 %v483, %v578
      %v580 = vpop.f32.mrf.mxu0
      %581 = vmatprep.mubr.bf16.mxu0 0
      %582 = vmatmul.mubr.bf16.gmra.mxu0 %v516
      %v583 = vpop.f32.mrf.mxu0
      %v584 = vadd.f32 %v483, %v583
      %v585 = vpop.f32.mrf.mxu0
      %v586 = vpop.f32.mrf.mxu0
      %v587 = vadd.f32 %v483, %v586
      %v588 = vpop.f32.mrf.mxu0
      %589 = vmatprep.mubr.bf16.mxu0 0
      %590 = vmatmul.mubr.bf16.gmra.mxu0 %v519
      %v591 = vpop.f32.mrf.mxu0
      %v592 = vadd.f32 %v483, %v591
      %v593 = vpop.f32.mrf.mxu0
      %v594 = vpop.f32.mrf.mxu0
      %v595 = vadd.f32 %v483, %v594
      %v596 = vpop.f32.mrf.mxu0
      %597 = vmatprep.mubr.bf16.mxu0 0
      %598 = vmatmul.mubr.bf16.gmra.mxu0 %v522
      %v599 = vpop.f32.mrf.mxu0
      %v600 = vadd.f32 %v483, %v599
      %v601 = vpop.f32.mrf.mxu0
      %v602 = vpop.f32.mrf.mxu0
      %v603 = vadd.f32 %v483, %v602
      %v604 = vpop.f32.mrf.mxu0
      %605 = vmatprep.mubr.bf16.mxu0 0
      %606 = vmatmul.mubr.bf16.gmra.mxu0 %v525
      %v607 = vpop.f32.mrf.mxu0
      %v608 = vadd.f32 %v483, %v607
      %v609 = vpop.f32.mrf.mxu0
      %v610 = vpop.f32.mrf.mxu0
      %v611 = vadd.f32 %v483, %v610
      %v612 = vpop.f32.mrf.mxu0
      %613 = vmatprep.mubr.bf16.mxu0 0
      %614 = vmatmul.mubr.bf16.gmra.mxu0 %v528
      %v615 = vpop.f32.mrf.mxu0
      %v616 = vadd.f32 %v483, %v615
      %v617 = vpop.f32.mrf.mxu0
      %v618 = vpop.f32.mrf.mxu0
      %v619 = vadd.f32 %v483, %v618
      %v620 = vpop.f32.mrf.mxu0
      %621 = vmatprep.mubr.bf16.mxu0 0
      %622 = vmatmul.mubr.bf16.gmra.mxu0 %v531
      %v623 = vpop.f32.mrf.mxu0
      %v624 = vadd.f32 %v483, %v623
      %v625 = vpop.f32.mrf.mxu0
      %v626 = vpop.f32.mrf.mxu0
      %v627 = vadd.f32 %v483, %v626
      %v628 = vpop.f32.mrf.mxu0
      %629 = vdwg.mxu0
      %vm630 = vcmask 130048
      %631 = vst.msk [vmem:[%s226] sm:$0xff] %vm630, %v568
      %632 = vst.msk [vmem:[%s226 + $0x8] sm:$0xff] %vm630, %v571
      %633 = vst.msk [vmem:[%s226 + $0x10] sm:$0xff] %vm630, %v576
      %634 = vst.msk [vmem:[%s226 + $0x18] sm:$0xff] %vm630, %v579
      %635 = vst.msk [vmem:[%s226 + $0x20] sm:$0xff] %vm630, %v584
      %636 = vst.msk [vmem:[%s226 + $0x28] sm:$0xff] %vm630, %v587
      %637 = vst.msk [vmem:[%s226 + $0x30] sm:$0xff] %vm630, %v592
      %638 = vst.msk [vmem:[%s226 + $0x38] sm:$0xff] %vm630, %v595
      %639 = vst.msk [vmem:[%s226 + $0x40] sm:$0xff] %vm630, %v600
      %640 = vst.msk [vmem:[%s226 + $0x48] sm:$0xff] %vm630, %v603
      %641 = vst.msk [vmem:[%s226 + $0x50] sm:$0xff] %vm630, %v608
      %642 = vst.msk [vmem:[%s226 + $0x58] sm:$0xff] %vm630, %v611
      %643 = vst.msk [vmem:[%s226 + $0x60] sm:$0xff] %vm630, %v616
      %644 = vst.msk [vmem:[%s226 + $0x68] sm:$0xff] %vm630, %v619
      %645 = vst.msk [vmem:[%s226 + $0x70] sm:$0xff] %vm630, %v624
      %646 = vst.msk [vmem:[%s226 + $0x78] sm:$0xff] %vm630, %v627
      %s647 = smul.u32 16, %s16
      %p648 = scmp.lt.s32.totalorder %s647, 63
      %s649 = scalar_select %p648, %s647, 63
      %s650 = smul.addr %s649, 8
      %s651 = scalar_lea.vmem %s5, %s650
      // Predicated region
      $region41: #{tpu_custom_call.1} parent=39 // pred_check
        %p652 = pneg %p144
      $region42: #{tpu_custom_call.1} parent=39 // pred_check_branch
        %654 = sbr.rel (%p652) target = $region44
      $region43: #{tpu_custom_call.1} parent=39 // pred_region
        %s655 = smul.u32 16, %s16
      $region44: #{tpu_custom_call.1} parent=39 // pred_fallthru
        _
    $region40: #{tpu_custom_call.1} parent=5 // pred_fallthru
      _
    %p656 = scmp.le.s32.totalorder 2, %s11
    // Predicated region
    $region45: #{tpu_custom_call.1} parent=5 // pred_check
      %p657 = pneg %p656
    $region46: #{tpu_custom_call.1} parent=5 // pred_check_branch
      %659 = sbr.rel (%p657) target = $region48
    $region47: #{tpu_custom_call.1} parent=5 // pred_region
      %s660 = ssub.s32 %s11, 2
      // Predicated region
      $region49: #{tpu_custom_call.1} parent=47 // pred_check
        %p661 = pneg %p150
      $region50: #{tpu_custom_call.1} parent=47 // pred_check_branch
        %663 = sbr.rel (%p661) target = $region52
      $region51: #{tpu_custom_call.1} parent=47 // pred_region
        %s664 = smul.u32 16, %s17
        %p665 = scmp.lt.s32.totalorder %s664, 63
        %s666 = scalar_select %p665, %s664, 63
        %s667 = smul.addr %s666, 8
        %s668 = scalar_lea.vmem %s5, %s667
      $region52: #{tpu_custom_call.1} parent=47 // pred_fallthru
        _
    $region48: #{tpu_custom_call.1} parent=5 // pred_fallthru
      _
  $region6: #{tpu_custom_call.1} parent=0 // loop_footer
    %s15 = sadd.s32 1, %s11
  $region7: #{tpu_custom_call.1} parent=0 // loop_footer_branch
    %10 = sbr.rel target = $region3
  $region8: #{tpu_custom_call.1} parent=0 // loop_exit
    _

</llo_original>
